<compile_context>
chip_gen: v7x
topology: tpu7x:2x2x1
jax: 0.10.0
libtpu: 0.0.40
codegen_flags: <defaults>
</compile_context>

<pallas_src>
import functools

import jax
import jax.numpy as jnp
from jax.experimental import pallas as pl
from jax.experimental.pallas import tpu as pltpu


# ----------------------------- kernels --------------------------------------


def head_kernel(x_ref, w1t_ref, shift_ref, w2t_ref, out_ref):
    """Channel-major 1x1-conv head on one pixel-column tile of one image.

    x_ref:     (1, C_in, TM)  float32   (native NCHW slice, cast to bf16 in-kernel)
    w1t_ref:   (C_proj, C_in) bfloat16  (eval-mode BN scale already folded in)
    shift_ref: (C_proj, 1)    float32   (folded BN shift)
    w2t_ref:   (2L, C_proj)   bfloat16
    out_ref:   (1, 2L, TM)    out dtype (bf16 by default) -- already NCHW layout.
    """
    x = x_ref[0].astype(jnp.bfloat16)                                     # VPU cast
    h = jnp.dot(w1t_ref[...], x, preferred_element_type=jnp.float32)     # (C_proj, TM)  MXU
    h = jnp.maximum(h + shift_ref[...], 0.0)                              # BN shift + ReLU
    o = jnp.dot(w2t_ref[...], h.astype(jnp.bfloat16),
                preferred_element_type=jnp.float32)                       # (2L, TM)      MXU
    out_ref[0] = o.astype(out_ref.dtype)


def decode_kernel(hm_ref, out_ref, *, topk, width, stride):
    """heatmap2coord on a (TR, HW) tile: iterative top-k + online-softmax expectation.

    Single-reduction top-k: each (bf16-exact) score and its column index are packed into one
    sortable int32 key, so every top-k step does ONE cross-lane max (XLU) plus one
    compare/select knock-out (VPU).  Keys are unique -> exactly one element removed per step,
    ties resolve to the lowest column index (matches a stable descending sort).
    """
    hm = hm_ref[0, 0].astype(jnp.float32)                       # (TR, HW)
    TR, HW = hm.shape

    # key = [order-preserving f32 bit pattern | 65535 - column].  The head output is bf16, so
    # the low 16 float bits are zero and dropping them is lossless (for an f32 head output the
    # selection would effectively compare at bf16 granularity).
    bits = pltpu.bitcast(hm, jnp.int32)
    okey = bits ^ ((bits >> 31) & jnp.int32(0x7FFFFFFF))        # monotone int32 view of f32
    col = jax.lax.broadcasted_iota(jnp.int32, (TR, HW), 1)
    key = (okey & jnp.int32(-65536)) | (jnp.int32(65535) - col)

    knocked = jnp.int32(jnp.iinfo(jnp.int32).min)
    wf = jnp.float32(width)

    def select_max(work):
        kmax = jnp.max(work, axis=-1, keepdims=True)            # ONE cross-lane reduce (XLU)
        work = jnp.where(work == kmax, knocked, work)           # knock out the winner  (VPU)
        inv_col = kmax & jnp.int32(65535)                       # (TR, 1) narrow recovery ops
        colf = jnp.float32(65535) - inv_col.astype(jnp.float32)
        skey = kmax - inv_col                                   # score key, low 16 bits now 0
        skey = skey | ((skey >> 31) & jnp.int32(65535))         # negative scores had 0xffff
        sbits = skey ^ ((skey >> 31) & jnp.int32(0x7FFFFFFF))   # undo the order map
        score = pltpu.bitcast(sbits, jnp.float32)               # exact score, (TR, 1)
        return work, score, colf

    def coords(colf):
        y = jnp.floor(colf / wf)                                # index // W (exact: HW <= 2^16)
        x = colf - y * wf                                       # index %  W
        return x, y

    # k = 0 establishes the running max (the first pick IS the max), so the online-softmax
    # weights exp(s_k - s0) <= 1 are numerically stable by construction.
    work, s0, col0 = select_max(key)
    x0, y0 = coords(col0)
    init = (work, jnp.ones_like(s0), x0, y0)                    # den = exp(0) = 1

    def body(_, carry):
        work, den, acc_x, acc_y = carry
        work, s, colf = select_max(work)
        p = jnp.exp(s - s0)                                     # EUP, (TR, 1)
        xk, yk = coords(colf)
        return work, den + p, acc_x + p * xk, acc_y + p * yk

    _, den, acc_x, acc_y = jax.lax.fori_loop(1, topk, body, init, unroll=True)

    inv = 1.0 / den                                             # once per tile, off the hot loop
    cx = jnp.float32(stride) * acc_x * inv                      # (TR, 1)
    cy = jnp.float32(stride) * acc_y * inv
    # One lane-dense store: x in lane 0, y in lane 1, zeros elsewhere (wrapper slices [:, :2]).
    lane = jax.lax.broadcasted_iota(jnp.int32, (TR, out_ref.shape[-1]), 1)
    out_ref[0] = jnp.where(lane == 0, cx, jnp.where(lane == 1, cy, 0.0))


# ----------------------------- wrapper ---------------------------------------


def heatmap_head_forward(x, params, *, topk=18, stride=4.0, tm=2048, tr=32,
                         out_dtype=jnp.bfloat16):
    """x: (N, C_in, H, W) float32 (NCHW, like PyTorch). Returns (binary_heats, lmks).

    NOTE: binary_heats is emitted in `out_dtype` (bf16 by default) to halve the dominant
    output HBM stream; pass out_dtype=jnp.float32 for full-precision heatmaps.
    """
    N, C_in, H, W = x.shape
    HW = H * W
    w1, scale, shift, w2 = params["w1"], params["scale"], params["shift"], params["w2"]
    C_proj = w1.shape[1]
    two_L = w2.shape[1]
    L = two_L // 2

    assert HW <= 65536, "decode packs the column index into 16 bits (requires H*W <= 65536)"
    assert topk <= HW

    # Fold eval-mode BN scale into conv1 and pre-transpose weights to channel-major layout.
    w1t = (w1 * scale).T.astype(jnp.bfloat16)                 # (C_proj, C_in)
    w2t = w2.T.astype(jnp.bfloat16)                           # (2L, C_proj)
    shift_col = shift.reshape(C_proj, 1).astype(jnp.float32)

    x3 = x.reshape(N, C_in, HW)                               # free reshape of the NCHW input

    # ---- head: grid over (image, pixel-column tile); ragged last tile masked by Pallas ----
    if HW <= tm:
        tm_eff = HW                                           # full last dim: always legal
    else:
        assert tm % 128 == 0
        tm_eff = tm
    n_pix = pl.cdiv(HW, tm_eff)

    heat = pl.pallas_call(
        head_kernel,
        out_shape=jax.ShapeDtypeStruct((N, two_L, HW), out_dtype),
        grid_spec=pltpu.PrefetchScalarGridSpec(
            num_scalar_prefetch=0,
            grid=(N, n_pix),
            in_specs=[
                pl.BlockSpec((1, C_in, tm_eff), lambda n, i: (n, 0, i)),
                pl.BlockSpec((C_proj, C_in), lambda n, i: (0, 0)),
                pl.BlockSpec((C_proj, 1), lambda n, i: (0, 0)),
                pl.BlockSpec((two_L, C_proj), lambda n, i: (0, 0)),
            ],
            out_specs=pl.BlockSpec((1, two_L, tm_eff), lambda n, i: (n, 0, i)),
        ),
        compiler_params=pltpu.CompilerParams(
            dimension_semantics=("parallel", "parallel")),
    )(x3, w1t, shift_col, w2t)

    binary_heats = heat.reshape(N, 2, L, H, W)                # free reshape (already NCHW)

    # ---- decode: foreground plane read straight from the head output (no staging copy) ----
    heat4 = heat.reshape(N, 2, L, HW)                         # free view
    if L <= tr:
        tr_eff = L                                            # full dim: always legal
    else:
        assert tr % 8 == 0
        tr_eff = tr
    n_l = pl.cdiv(L, tr_eff)                                  # ragged last tile masked

    coords = pl.pallas_call(
        functools.partial(decode_kernel, topk=topk, width=float(W), stride=float(stride)),
        out_shape=jax.ShapeDtypeStruct((N, L, 128), jnp.float32),
        grid_spec=pltpu.PrefetchScalarGridSpec(
            num_scalar_prefetch=0,
            grid=(N, n_l),
            in_specs=[
                # Block index 1 on the size-2 axis selects the foreground plane directly.
                pl.BlockSpec((1, 1, tr_eff, HW), lambda n, li: (n, 1, li, 0)),
            ],
            out_specs=pl.BlockSpec((1, tr_eff, 128), lambda n, li: (n, li, 0)),
        ),
        compiler_params=pltpu.CompilerParams(
            dimension_semantics=("parallel", "parallel")),
    )(heat4)

    lmks = coords[:, :, :2]                                   # (N, L, 2) = [x, y] per landmark
    return binary_heats, lmks


# ----------------------------- references (pure JAX, for checking) -----------


def reference_head(x, params, *, out_dtype=jnp.bfloat16):
    """Pure-JAX head mirroring the kernel math (BN scale folded, bf16 operands, f32 accum)."""
    N, C_in, H, W = x.shape
    w1, scale, shift, w2 = params["w1"], params["scale"], params["shift"], params["w2"]
    C_proj = w1.shape[1]
    two_L = w2.shape[1]
    L = two_L // 2
    w1t = (w1 * scale).T.astype(jnp.bfloat16)                 # (C_proj, C_in)
    w2t = w2.T.astype(jnp.bfloat16)                           # (2L, C_proj)
    xb = x.reshape(N, C_in, H * W).astype(jnp.bfloat16)
    h = jnp.einsum("pc,ncm->npm", w1t, xb, preferred_element_type=jnp.float32)
    h = jnp.maximum(h + shift.reshape(1, C_proj, 1), 0.0)
    o = jnp.einsum("op,npm->nom", w2t, h.astype(jnp.bfloat16),
                   preferred_element_type=jnp.float32)
    return o.astype(out_dtype).reshape(N, 2, L, H, W)


def reference_decode(binary_heats, *, topk, stride):
    """heatmap2coord (ties broken by lowest flat index) on the foreground plane, pure JAX."""
    N, _, L, H, W = binary_heats.shape
    hm = binary_heats[:, 1].reshape(N, L, H * W).astype(jnp.float32)
    bits = jax.lax.bitcast_convert_type(hm, jnp.int32)
    okey = bits ^ ((bits >> 31) & jnp.int32(0x7FFFFFFF))
    col = jax.lax.broadcasted_iota(jnp.int32, hm.shape, 2)
    key = (okey & jnp.int32(-65536)) | (jnp.int32(65535) - col)
    topkey, _ = jax.lax.top_k(key, topk)                      # unique keys -> deterministic
    inv = topkey & jnp.int32(65535)
    idx = 65535 - inv
    skey = topkey - inv
    skey = skey | ((skey >> 31) & jnp.int32(65535))
    sbits = skey ^ ((skey >> 31) & jnp.int32(0x7FFFFFFF))
    score = jax.lax.bitcast_convert_type(sbits, jnp.float32)
    xs = (idx % W).astype(jnp.float32)
    ys = (idx // W).astype(jnp.float32)
    p = jax.nn.softmax(score, axis=-1)
    return stride * jnp.stack([(xs * p).sum(-1), (ys * p).sum(-1)], axis=-1)


# ----------------------------- main -------------------------------------------


if __name__ == "__main__":
    # Small shapes consistent with the module structure (real module: C_in=152, proj=152, L=106).
    N, C_in, C_proj, L, H, W = 2, 16, 16, 8, 16, 16
    TOPK, STRIDE = 18, 4.0

    key = jax.random.PRNGKey(0)
    kx, k1, k2, k3, k4, k5, k6 = jax.random.split(key, 7)

    x = jax.random.normal(kx, (N, C_in, H, W), jnp.float32)

    # Deterministic synthetic parameters (conv weights stored (in, out); transposed in wrapper).
    w1 = 0.1 * jax.random.normal(k1, (C_in, C_proj), jnp.float32)
    w2 = 0.1 * jax.random.normal(k2, (C_proj, 2 * L), jnp.float32)
    gamma = 1.0 + 0.1 * jax.random.normal(k3, (C_proj,), jnp.float32)
    beta = 0.1 * jax.random.normal(k4, (C_proj,), jnp.float32)
    run_mean = 0.1 * jax.random.normal(k5, (C_proj,), jnp.float32)
    run_var = jnp.abs(jax.random.normal(k6, (C_proj,), jnp.float32)) + 0.5
    eps = 1e-5
    inv_std = 1.0 / jnp.sqrt(run_var + eps)
    scale = (gamma * inv_std).reshape(1, C_proj)
    shift = (beta - run_mean * gamma * inv_std).reshape(1, C_proj)

    params = {"w1": w1, "scale": scale, "shift": shift, "w2": w2}

    binary_heats, lmks = heatmap_head_forward(x, params, topk=TOPK, stride=STRIDE,
                                              tm=2048, tr=32)
    jax.block_until_ready((binary_heats, lmks))

    assert binary_heats.shape == (N, 2, L, H, W)
    assert lmks.shape == (N, L, 2)

    # Head check: independent pure-JAX recomputation of the heatmaps.
    bh_ref = reference_head(x, params, out_dtype=jnp.bfloat16)
    assert jnp.allclose(binary_heats.astype(jnp.float32), bh_ref.astype(jnp.float32),
                        rtol=2e-2, atol=2e-2)

    # Decode check: pure-JAX top-k/softmax decode applied to the SAME heatmaps the kernel saw
    # (isolates decode correctness from bf16 matmul rounding in the head).
    lmks_ref = reference_decode(binary_heats, topk=TOPK, stride=STRIDE)
    assert jnp.allclose(lmks, lmks_ref, rtol=1e-3, atol=1e-2)

    print("KERNEL_OK")
</pallas_src>

<mosaic_0001>
module attributes {stable_mosaic.version = 11 : i64} {
  func.func @head_kernel(%arg0: i32, %arg1: i32, %arg2: memref<1x16x256xf32, #tpu.memory_space<vmem>>, %arg3: memref<16x16xbf16, #tpu.memory_space<vmem>>, %arg4: memref<16x1xf32, #tpu.memory_space<vmem>>, %arg5: memref<16x16xbf16, #tpu.memory_space<vmem>>, %arg6: memref<1x16x256xbf16, #tpu.memory_space<vmem>>) attributes {dimension_semantics = [#tpu.dimension_semantics<parallel>, #tpu.dimension_semantics<parallel>], iteration_bounds = array<i64: 2, 1>, scalar_prefetch = 0 : i64, scratch_operands = 0 : i64, tpu.core_type = #tpu.core_type<tc>, window_params = [{transform_indices = @transform_0, window_bounds = array<i64: 1, 16, 256>}, {pipeline_mode = #tpu.pipeline_mode<synchronous>, transform_indices = @transform_1, window_bounds = array<i64: 16, 16>}, {pipeline_mode = #tpu.pipeline_mode<synchronous>, transform_indices = @transform_2, window_bounds = array<i64: 16, 1>}, {pipeline_mode = #tpu.pipeline_mode<synchronous>, transform_indices = @transform_3, window_bounds = array<i64: 16, 16>}, {transform_indices = @transform_4, window_bounds = array<i64: 1, 16, 256>}]} {
    %c0 = arith.constant 0 : index
    %c0_0 = arith.constant 0 : index
    %c0_1 = arith.constant 0 : index
    %0 = vector.load %arg2[%c0, %c0_0, %c0_1] : memref<1x16x256xf32, #tpu.memory_space<vmem>>, vector<1x16x256xf32>
    %1 = vector.shape_cast %0 : vector<1x16x256xf32> to vector<16x256xf32>
    %2 = arith.truncf %1 : vector<16x256xf32> to vector<16x256xbf16>
    %c0_2 = arith.constant 0 : index
    %c0_3 = arith.constant 0 : index
    %3 = vector.load %arg3[%c0_2, %c0_3] : memref<16x16xbf16, #tpu.memory_space<vmem>>, vector<16x16xbf16>
    %cst = arith.constant dense<0.000000e+00> : vector<16x256xf32>
    %4 = tpu.matmul %3, %2, %cst {dimension_numbers = #tpu.dot_dimension_numbers<[1], [0], [0], [1], [0, 0, 1, 1], [], []>} : vector<16x16xbf16>, vector<16x256xbf16>, vector<16x256xf32> -> vector<16x256xf32>
    %c0_4 = arith.constant 0 : index
    %c0_5 = arith.constant 0 : index
    %5 = vector.load %arg4[%c0_4, %c0_5] : memref<16x1xf32, #tpu.memory_space<vmem>>, vector<16x1xf32>
    %6 = vector.broadcast %5 : vector<16x1xf32> to vector<16x256xf32>
    %7 = arith.addf %4, %6 : vector<16x256xf32>
    %cst_6 = arith.constant 0.000000e+00 : f32
    %8 = vector.broadcast %cst_6 : f32 to vector<16x256xf32>
    %9 = arith.maximumf %7, %8 : vector<16x256xf32>
    %c0_7 = arith.constant 0 : index
    %c0_8 = arith.constant 0 : index
    %10 = vector.load %arg5[%c0_7, %c0_8] : memref<16x16xbf16, #tpu.memory_space<vmem>>, vector<16x16xbf16>
    %11 = arith.truncf %9 : vector<16x256xf32> to vector<16x256xbf16>
    %cst_9 = arith.constant dense<0.000000e+00> : vector<16x256xf32>
    %12 = tpu.matmul %10, %11, %cst_9 {dimension_numbers = #tpu.dot_dimension_numbers<[1], [0], [0], [1], [0, 0, 1, 1], [], []>} : vector<16x16xbf16>, vector<16x256xbf16>, vector<16x256xf32> -> vector<16x256xf32>
    %13 = arith.truncf %12 : vector<16x256xf32> to vector<16x256xbf16>
    %c0_10 = arith.constant 0 : index
    %c0_11 = arith.constant 0 : index
    %c0_12 = arith.constant 0 : index
    %14 = vector.load %arg6[%c0_10, %c0_11, %c0_12] : memref<1x16x256xbf16, #tpu.memory_space<vmem>>, vector<1x16x256xbf16>
    %15 = vector.shape_cast %14 : vector<1x16x256xbf16> to vector<16x256xbf16>
    %16 = vector.shape_cast %13 : vector<16x256xbf16> to vector<1x16x256xbf16>
    tpu.vector_store %arg6[%c0_10, %c0_11, %c0_12], %16 {strides = array<i32>} : memref<1x16x256xbf16, #tpu.memory_space<vmem>>, vector<1x16x256xbf16>,
    return
  }
  func.func @transform_0(%arg0: i32, %arg1: i32) -> (i32, i32, i32) {
    %c0_i32 = arith.constant 0 : i32
    %c0_i32_0 = arith.constant 0 : i32
    return %arg0, %c0_i32, %arg1 : i32, i32, i32
  }
  func.func @transform_1(%arg0: i32, %arg1: i32) -> (i32, i32) {
    %c0_i32 = arith.constant 0 : i32
    %c0_i32_0 = arith.constant 0 : i32
    %c0_i32_1 = arith.constant 0 : i32
    return %c0_i32, %c0_i32_0 : i32, i32
  }
  func.func @transform_2(%arg0: i32, %arg1: i32) -> (i32, i32) {
    %c0_i32 = arith.constant 0 : i32
    %c0_i32_0 = arith.constant 0 : i32
    %c0_i32_1 = arith.constant 0 : i32
    return %c0_i32, %c0_i32_0 : i32, i32
  }
  func.func @transform_3(%arg0: i32, %arg1: i32) -> (i32, i32) {
    %c0_i32 = arith.constant 0 : i32
    %c0_i32_0 = arith.constant 0 : i32
    %c0_i32_1 = arith.constant 0 : i32
    return %c0_i32, %c0_i32_0 : i32, i32
  }
  func.func @transform_4(%arg0: i32, %arg1: i32) -> (i32, i32, i32) {
    %c0_i32 = arith.constant 0 : i32
    %c0_i32_0 = arith.constant 0 : i32
    return %arg0, %c0_i32, %arg1 : i32, i32, i32
  }
}

</mosaic_0001>

<llo_original>
// kernel: tpu_custom_call.1
$region0: #{tpu_custom_call.1}
  #allocation0 [shape = 'u32[]', space=smem, size = 0x4, offset = 0x4, fixed_abs, tag = 'smem constant byte address 0x4 - core index']
  #allocation1 [shape = 'u32[144,128]{1,0:T(1,128)}', space=vmem, size = 0x12000, scoped, tag = 'internal scratch']
  %s0 = inlined_call_operand.hbm [shape: f32[2,16,256], index: 0, kind: input, shape index: {}]
  %s1 = inlined_call_operand.vmem [shape: bf16[16,16], index: 1, kind: input, shape index: {}]
  %s2 = inlined_call_operand.vmem [shape: f32[16,1], index: 2, kind: input, shape index: {}]
  %s3 = inlined_call_operand.vmem [shape: bf16[16,16], index: 3, kind: input, shape index: {}]
  %s4 = inlined_call_operand.hbm [shape: bf16[2,16,256], index: 4, kind: output, shape index: {}]
  %s5 = sld [smem:[#allocation0]]
  $region53: #{tpu_custom_call.1} parent=0
    _
  %s7 = ssub.s32 1, %s5
  %s8 = scalar_select 0, %s7, %s5
  $region1: #{tpu_custom_call.1} parent=0
    #allocation2 [shape = 'u8[32768]{0}', space=vmem, size = 0x8000, scoped, tag = 'input window, operand 0']
    #allocation3 [shape = 's32[2]{0}', space=sflag, size = 0x8, scoped, tag = 'scoped memory for tpu_custom_call.1']
    #allocation4 [shape = 's32[2]{0}', space=sflag, size = 0x8, scoped, tag = 'scoped memory for tpu_custom_call.1']
    #allocation5 [shape = 'u8[16384]{0}', space=vmem, size = 0x4000, scoped, tag = 'output window, operand 0']
    %9 = vsyncpa [#allocation3], 0
    %s10 = scalar_lea.sflag [#allocation3], 1
    %11 = vsyncpa %s10, 0
    %12 = vsyncpa [#allocation4], 0
    %s13 = scalar_lea.sflag [#allocation4], 1
    %14 = vsyncpa %s13, 0
    loop: start=0, step=1, limit=4
    $region2: #{tpu_custom_call.1} parent=1 // loop_pre_header
      _
    $region3: #{tpu_custom_call.1} parent=1 // loop_header
      %s16 = sphi 0, %s20
      %p17 = scmp.ge.s32.totalorder %s16, 4
      %s23 = sphi 0, %s35
      %s24 = sphi 0, %s31
      %s25 = sphi 0, %s23
      %s26 = sphi 0, %s24
      %s27 = sphi 0, %s25
      %s28 = sphi 0, %s26
      %s40 = sphi 0, %s42
      %s43 = sphi 0, %s40
      %s44 = sphi 0, %s43
      %s60 = sphi 0, %s44
      %s64 = sphi 0, %s64
      %s66 = sphi 0, %s64
      %s67 = sphi 0, %s66
      %s81 = sphi 0, %s67
      %s85 = sphi 0, %s85
      %s87 = sphi 0, %s85
      %s88 = sphi 0, %s87
      %s102 = sphi 0, %s88
      %s106 = sphi 0, %s106
      %s108 = sphi 0, %s106
      %s109 = sphi 0, %s108
      %s123 = sphi 0, %s109
      %s131 = sphi 0, %s133
      %s134 = sphi 0, %s131
      %s135 = sphi 0, %s134
      %s151 = sphi 0, %s135
    $region4: #{tpu_custom_call.1} parent=1 // loop_header_branch
      %19 = sbr.rel (%p17) target = $region8
    $region5: #{tpu_custom_call.1} parent=1 // loop_body
      %s21 = ssub.s32 %s16, 1
      %s22 = ssub.s32 %s16, 2
      %s29 = sadd.s32 1, %s24
      %p30 = scmp.ge.s32.totalorder %s29, 1
      %s31 = scalar_select %p30, 0, %s29
      %s32 = sadd.s32 1, %s23
      %s33 = scalar_select %p30, %s32, %s23
      %p34 = scmp.ge.s32.totalorder %s33, 2
      %s35 = scalar_select %p34, 0, %s33
      %s36 = ssub.s32 %s23, %s35
      %s37 = ssub.s32 %s24, %s31
      %s38 = sor.u32 %s36, %s37
      %p39 = scmp.eq.s32.totalorder %s38, 0
      %s41 = sadd.s32 %s40, 1
      %s42 = scalar_select %p39, %s40, %s41
      %p45 = pneg %p39
      %p46 = scmp.eq.s32.totalorder %s16, 1
      %p47 = por %p45, %p46
      %p48 = scmp.ne.s32.totalorder %s40, %s43
      %p49 = scmp.eq.s32.totalorder %s16, 0
      %p50 = por %p48, %p49
      %p51 = scmp.ne.s32.totalorder %s40, %s43
      %p52 = scmp.eq.s32.totalorder %s21, 1
      %p53 = por %p51, %p52
      %p54 = scmp.ne.s32.totalorder %s43, %s44
      %p55 = scmp.eq.s32.totalorder %s21, 0
      %p56 = por %p54, %p55
      %p57 = scmp.ne.s32.totalorder %s43, %s44
      %p58 = scmp.eq.s32.totalorder %s22, 1
      %p59 = por %p57, %p58
      %p61 = scmp.ne.s32.totalorder %s44, %s60
      %p62 = scmp.eq.s32.totalorder %s22, 0
      %p63 = por %p61, %p62
      %s65 = sadd.s32 %s64, 1
      %p68 = scmp.eq.s32.totalorder %s16, 1
      %p69 = scmp.ne.s32.totalorder %s64, %s66
      %p70 = scmp.eq.s32.totalorder %s16, 0
      %p71 = por %p69, %p70
      %p72 = scmp.ne.s32.totalorder %s64, %s66
      %p73 = scmp.eq.s32.totalorder %s21, 1
      %p74 = por %p72, %p73
      %p75 = scmp.ne.s32.totalorder %s66, %s67
      %p76 = scmp.eq.s32.totalorder %s21, 0
      %p77 = por %p75, %p76
      %p78 = scmp.ne.s32.totalorder %s66, %s67
      %p79 = scmp.eq.s32.totalorder %s22, 1
      %p80 = por %p78, %p79
      %p82 = scmp.ne.s32.totalorder %s67, %s81
      %p83 = scmp.eq.s32.totalorder %s22, 0
      %p84 = por %p82, %p83
      %s86 = sadd.s32 %s85, 1
      %p89 = scmp.eq.s32.totalorder %s16, 1
      %p90 = scmp.ne.s32.totalorder %s85, %s87
      %p91 = scmp.eq.s32.totalorder %s16, 0
      %p92 = por %p90, %p91
      %p93 = scmp.ne.s32.totalorder %s85, %s87
      %p94 = scmp.eq.s32.totalorder %s21, 1
      %p95 = por %p93, %p94
      %p96 = scmp.ne.s32.totalorder %s87, %s88
      %p97 = scmp.eq.s32.totalorder %s21, 0
      %p98 = por %p96, %p97
      %p99 = scmp.ne.s32.totalorder %s87, %s88
      %p100 = scmp.eq.s32.totalorder %s22, 1
      %p101 = por %p99, %p100
      %p103 = scmp.ne.s32.totalorder %s88, %s102
      %p104 = scmp.eq.s32.totalorder %s22, 0
      %p105 = por %p103, %p104
      %s107 = sadd.s32 %s106, 1
      %p110 = scmp.eq.s32.totalorder %s16, 1
      %p111 = scmp.ne.s32.totalorder %s106, %s108
      %p112 = scmp.eq.s32.totalorder %s16, 0
      %p113 = por %p111, %p112
      %p114 = scmp.ne.s32.totalorder %s106, %s108
      %p115 = scmp.eq.s32.totalorder %s21, 1
      %p116 = por %p114, %p115
      %p117 = scmp.ne.s32.totalorder %s108, %s109
      %p118 = scmp.eq.s32.totalorder %s21, 0
      %p119 = por %p117, %p118
      %p120 = scmp.ne.s32.totalorder %s108, %s109
      %p121 = scmp.eq.s32.totalorder %s22, 1
      %p122 = por %p120, %p121
      %p124 = scmp.ne.s32.totalorder %s109, %s123
      %p125 = scmp.eq.s32.totalorder %s22, 0
      %p126 = por %p124, %p125
      %s127 = ssub.s32 %s23, %s35
      %s128 = ssub.s32 %s24, %s31
      %s129 = sor.u32 %s127, %s128
      %p130 = scmp.eq.s32.totalorder %s129, 0
      %s132 = sadd.s32 %s131, 1
      %s133 = scalar_select %p130, %s131, %s132
      %p136 = pneg %p130
      %p137 = scmp.eq.s32.totalorder %s16, 1
      %p138 = por %p136, %p137
      %p139 = scmp.ne.s32.totalorder %s131, %s134
      %p140 = scmp.eq.s32.totalorder %s16, 0
      %p141 = por %p139, %p140
      %p142 = scmp.ne.s32.totalorder %s131, %s134
      %p143 = scmp.eq.s32.totalorder %s21, 1
      %p144 = por %p142, %p143
      %p145 = scmp.ne.s32.totalorder %s134, %s135
      %p146 = scmp.eq.s32.totalorder %s21, 0
      %p147 = por %p145, %p146
      %p148 = scmp.ne.s32.totalorder %s134, %s135
      %p149 = scmp.eq.s32.totalorder %s22, 1
      %p150 = por %p148, %p149
      %p152 = scmp.ne.s32.totalorder %s135, %s151
      %p153 = scmp.eq.s32.totalorder %s22, 0
      %p154 = por %p152, %p153
      %p155 = scmp.le.s32.totalorder 1, %s16
      %p156 = scmp.lt.s32.totalorder %s16, 3
      %p157 = pnand %p155, %p156
      %p158 = pneg %p157
      // Predicated region
      $region9: #{tpu_custom_call.1} parent=5 // pred_check
        _
      $region10: #{tpu_custom_call.1} parent=5 // pred_check_branch
        %160 = sbr.rel (%p157) target = $region12
      $region11: #{tpu_custom_call.1} parent=5 // pred_region
        %s161 = ssub.s32 %s16, 1
        // Predicated region
        $region13: #{tpu_custom_call.1} parent=11 // pred_check
          %p162 = pneg %p77
        $region14: #{tpu_custom_call.1} parent=11 // pred_check_branch
          %164 = sbr.rel (%p162) target = $region16
        $region15: #{tpu_custom_call.1} parent=11 // pred_region
          _
        $region16: #{tpu_custom_call.1} parent=11 // pred_fallthru
          _
        // Predicated region
        $region17: #{tpu_custom_call.1} parent=11 // pred_check
          %p165 = pneg %p98
        $region18: #{tpu_custom_call.1} parent=11 // pred_check_branch
          %167 = sbr.rel (%p165) target = $region20
        $region19: #{tpu_custom_call.1} parent=11 // pred_region
          _
        $region20: #{tpu_custom_call.1} parent=11 // pred_fallthru
          _
        // Predicated region
        $region21: #{tpu_custom_call.1} parent=11 // pred_check
          %p168 = pneg %p119
        $region22: #{tpu_custom_call.1} parent=11 // pred_check_branch
          %170 = sbr.rel (%p168) target = $region24
        $region23: #{tpu_custom_call.1} parent=11 // pred_region
          _
        $region24: #{tpu_custom_call.1} parent=11 // pred_fallthru
          _
      $region12: #{tpu_custom_call.1} parent=5 // pred_fallthru
        _
      %p171 = scmp.lt.s32.totalorder %s16, 2
      // Predicated region
      $region25: #{tpu_custom_call.1} parent=5 // pred_check
        %p172 = pneg %p171
      $region26: #{tpu_custom_call.1} parent=5 // pred_check_branch
        %174 = sbr.rel (%p172) target = $region28
      $region27: #{tpu_custom_call.1} parent=5 // pred_region
        // Predicated region
        $region29: #{tpu_custom_call.1} parent=27 // pred_check
          %p175 = pneg %p50
        $region30: #{tpu_custom_call.1} parent=27 // pred_check_branch
          %177 = sbr.rel (%p175) target = $region32
        $region31: #{tpu_custom_call.1} parent=27 // pred_region
          %s178 = sand.u32 %s40, 1
          %s179 = scalar_lea.sflag [#allocation3], %s178
          %s180 = sand.u32 %s40, 1
          %s181 = smul.addr %s180, 32
          %s182 = scalar_lea.vmem [#allocation2], %s181
          %s183 = smul.u32 2, %s24
          %s185 = ssub.s32 512, 512
          %186 = vsyncadd %s179, %s185
          %s187 = smul.addr %s23, 4
          %s188 = sadd.s32 %s183, %s187
          %s189 = smul.addr %s188, 128
          %s190 = scalar_lea.hbm %s0, %s189
          %s191 = sshll.u32 %s182, 4
          %s192 = int_to_ptr.vmem [resolvable:$true] %s191
          %197 = dma.hbm_to_vmem [thread:$0]  %s190, 512, %s192, %s179, 256, 256, 16
        $region32: #{tpu_custom_call.1} parent=27 // pred_fallthru
          _
      $region28: #{tpu_custom_call.1} parent=5 // pred_fallthru
        _
      %p198 = scmp.le.s32.totalorder 1, %s16
      %p199 = scmp.lt.s32.totalorder %s16, 3
      %p200 = pnand %p198, %p199
      %p201 = pneg %p200
      // Predicated region
      $region33: #{tpu_custom_call.1} parent=5 // pred_check
        _
      $region34: #{tpu_custom_call.1} parent=5 // pred_check_branch
        %203 = sbr.rel (%p200) target = $region36
      $region35: #{tpu_custom_call.1} parent=5 // pred_region
        %s204 = ssub.s32 %s16, 1
        %s205 = sand.u32 %s43, 1
        %s206 = scalar_lea.sflag [#allocation3], %s205
        %s207 = sand.u32 %s43, 1
        %s208 = smul.addr %s207, 32
        %s209 = scalar_lea.vmem [#allocation2], %s208
        // Predicated region
        $region37: #{tpu_custom_call.1} parent=35 // pred_check
          %p210 = pneg %p56
        $region38: #{tpu_custom_call.1} parent=35 // pred_check_branch
          %212 = sbr.rel (%p210) target = $region40
        $region39: #{tpu_custom_call.1} parent=35 // pred_region
          %213 = dma.done %s206, 512
        $region40: #{tpu_custom_call.1} parent=35 // pred_fallthru
          _
        %s214 = sand.u32 %s43, 1
        %s215 = scalar_lea.sflag [#allocation3], %s214
        %s216 = sand.u32 %s43, 1
        %s217 = smul.addr %s216, 32
        %s218 = scalar_lea.vmem [#allocation2], %s217
        %p219 = pneg %p56
        %p220 = pneg %p53
        %p221 = pneg %p77
        %p222 = pneg %p74
        %p223 = pneg %p98
        %p224 = pneg %p95
        %p225 = pneg %p119
        %p226 = pneg %p116
        %p227 = pneg %p147
        %p228 = pneg %p144
        %s229 = sand.u32 %s134, 1
        %s230 = scalar_lea.sflag [#allocation4], %s229
        %s231 = sand.u32 %s134, 1
        %s232 = smul.addr %s231, 16
        %s233 = scalar_lea.vmem [#allocation5], %s232
        %s234 = smul.u32 2, %s26
        %s235 = smul.u32 2, %s26
        %v237 = vld [vmem:[%s209] sm:$0xff]
        %v238 = vld [vmem:[%s209 + $0x8] sm:$0xff]
        %v239 = vld [vmem:[%s209 + $0x10] sm:$0xff]
        %v240 = vld [vmem:[%s209 + $0x18] sm:$0xff]
        %v241 = vpack.c.bf16 %v239, %v237
        %v242 = vpack.c.bf16 %v240, %v238
        %v243 = vld [vmem:[%s1] sm:$0xf]
        %v244 = vld [vmem:[%s1 + $0x4] sm:$0xf]
        %v245 = vld [vmem:[%s2] sm:$0xff]
        %v246 = vld [vmem:[%s2 + $0x8] sm:$0xff]
        %248 = vset.pattern.permute.xlu0 0
        %249 = vperm.xlu0 %248, %v245
        %v250 = vpop.permute.xlu0 %249
        %253 = vset.pattern.permute.xlu0 0
        %254 = vperm.xlu0 %253, %v246
        %v255 = vpop.permute.xlu0 %254
        %v259 = vunpack.c.l.b16 %v243
        %v260 = vunpack.c.l.b16 %v244
        %v261 = vpack.c.b16 %v260, %v259
        %vm262 = vcmask 130048
        %v264 = vsel %vm262, %v261, 0
        %266 = vmatprep.subr.bf16.mxu0 %v242
        %267 = vmatpush1.bf16.msra.mxu0 %v241
        %268 = vmatprep.subr.bf16.mxu0 0
        %269 = vmatpush1.bf16.msra.mxu0 0
        %270 = vmatprep.subr.bf16.mxu0 0
        %271 = vmatpush1.bf16.msra.mxu0 0
        %272 = vmatprep.subr.bf16.mxu0 0
        %273 = vmatpush1.bf16.msra.mxu0 0
        %274 = vmatprep.subr.bf16.mxu0 0
        %275 = vmatpush1.bf16.msra.mxu0 0
        %276 = vmatprep.subr.bf16.mxu0 0
        %277 = vmatpush1.bf16.msra.mxu0 0
        %278 = vmatprep.subr.bf16.mxu0 0
        %279 = vmatpush1.bf16.msra.mxu0 0
        %280 = vmatprep.subr.bf16.mxu0 0
        %281 = vmatpush1.bf16.msra.mxu0 0
        %282 = vmatprep.subr.bf16.mxu0 0
        %283 = vmatpush1.bf16.msra.mxu0 0
        %284 = vmatprep.subr.bf16.mxu0 0
        %285 = vmatpush1.bf16.msra.mxu0 0
        %286 = vmatprep.subr.bf16.mxu0 0
        %287 = vmatpush1.bf16.msra.mxu0 0
        %288 = vmatprep.subr.bf16.mxu0 0
        %289 = vmatpush1.bf16.msra.mxu0 0
        %290 = vmatprep.subr.bf16.mxu0 0
        %291 = vmatpush1.bf16.msra.mxu0 0
        %292 = vmatprep.subr.bf16.mxu0 0
        %293 = vmatpush1.bf16.msra.mxu0 0
        %294 = vmatprep.subr.bf16.mxu0 0
        %295 = vmatpush1.bf16.msra.mxu0 0
        %296 = vmatprep.subr.bf16.mxu0 0
        %297 = vmatpush1.bf16.msra.mxu0 0
        %298 = vmatprep.mubr.bf16.mxu0 0
        %299 = vmatmul.mubr.bf16.gmra.mrb[0].mxu0 %v264
        %v300 = vpop.f32.mrb[0].mxu0
        %v301 = vadd.f32 %v250, %v300
        %v302 = vpop.f32.mrb[0].mxu0
        %v303 = vadd.f32 %v250, %v302
        %v304 = vpop.f32.mrb[0].mxu0
        %v305 = vadd.f32 %v255, %v304
        %v306 = vpop.f32.mrb[0].mxu0
        %v307 = vadd.f32 %v255, %v306
        %308 = vdwg.mxu0
        %v309 = vmax.f32 %v301, 0.0
        %v310 = vmax.f32 %v303, 0.0
        %v311 = vmax.f32 %v305, 0.0
        %v312 = vmax.f32 %v307, 0.0
        %v313 = vld [vmem:[%s3] sm:$0xf]
        %v314 = vld [vmem:[%s3 + $0x4] sm:$0xf]
        %v315 = vpack.c.bf16 %v311, %v309
        %v316 = vpack.c.bf16 %v312, %v310
        %v319 = vunpack.c.l.b16 %v313
        %v320 = vunpack.c.l.b16 %v314
        %v321 = vpack.c.b16 %v320, %v319
        %v323 = vsel %vm262, %v321, 0
        %325 = vmatprep.subr.bf16.mxu0 %v316
        %326 = vmatpush1.bf16.msra.mxu0 %v315
        %327 = vmatprep.subr.bf16.mxu0 0
        %328 = vmatpush1.bf16.msra.mxu0 0
        %329 = vmatprep.subr.bf16.mxu0 0
        %330 = vmatpush1.bf16.msra.mxu0 0
        %331 = vmatprep.subr.bf16.mxu0 0
        %332 = vmatpush1.bf16.msra.mxu0 0
        %333 = vmatprep.subr.bf16.mxu0 0
        %334 = vmatpush1.bf16.msra.mxu0 0
        %335 = vmatprep.subr.bf16.mxu0 0
        %336 = vmatpush1.bf16.msra.mxu0 0
        %337 = vmatprep.subr.bf16.mxu0 0
        %338 = vmatpush1.bf16.msra.mxu0 0
        %339 = vmatprep.subr.bf16.mxu0 0
        %340 = vmatpush1.bf16.msra.mxu0 0
        %341 = vmatprep.subr.bf16.mxu0 0
        %342 = vmatpush1.bf16.msra.mxu0 0
        %343 = vmatprep.subr.bf16.mxu0 0
        %344 = vmatpush1.bf16.msra.mxu0 0
        %345 = vmatprep.subr.bf16.mxu0 0
        %346 = vmatpush1.bf16.msra.mxu0 0
        %347 = vmatprep.subr.bf16.mxu0 0
        %348 = vmatpush1.bf16.msra.mxu0 0
        %349 = vmatprep.subr.bf16.mxu0 0
        %350 = vmatpush1.bf16.msra.mxu0 0
        %351 = vmatprep.subr.bf16.mxu0 0
        %352 = vmatpush1.bf16.msra.mxu0 0
        %353 = vmatprep.subr.bf16.mxu0 0
        %354 = vmatpush1.bf16.msra.mxu0 0
        %355 = vmatprep.subr.bf16.mxu0 0
        %356 = vmatpush1.bf16.msra.mxu0 0
        %357 = vmatprep.mubr.bf16.mxu0 0
        %358 = vmatmul.mubr.bf16.gmra.mrb[0].mxu0 %v323
        %v359 = vpop.f32.mrb[0].mxu0
        %v360 = vadd.f32 0.0, %v359
        %v361 = vpop.f32.mrb[0].mxu0
        %v362 = vadd.f32 0.0, %v361
        %v363 = vpop.f32.mrb[0].mxu0
        %v364 = vadd.f32 0.0, %v363
        %v365 = vpop.f32.mrb[0].mxu0
        %v366 = vadd.f32 0.0, %v365
        %367 = vdwg.mxu0
        %v368 = vpack.c.bf16 %v364, %v360
        %v369 = vpack.c.bf16 %v366, %v362
        %v372 = vunpack.c.l.b16 %v368
        %v373 = vunpack.c.l.b16 %v369
        %v374 = vunpack.c.h.b16 %v368
        %v375 = vunpack.c.h.b16 %v369
        %v376 = vpack.c.b16 %v373, %v372
        %v377 = vpack.c.b16 %v375, %v374
        %380 = vst [vmem:[%s233] sm:$0xff] %v376
        %381 = vst [vmem:[%s233 + $0x8] sm:$0xff] %v377
        %s382 = sand.u32 %s134, 1
        %s383 = scalar_lea.sflag [#allocation4], %s382
        %s384 = sand.u32 %s134, 1
        %s385 = smul.addr %s384, 16
        %s386 = scalar_lea.vmem [#allocation5], %s385
        // Predicated region
        $region41: #{tpu_custom_call.1} parent=35 // pred_check
          %p387 = pneg %p144
        $region42: #{tpu_custom_call.1} parent=35 // pred_check_branch
          %389 = sbr.rel (%p387) target = $region44
        $region43: #{tpu_custom_call.1} parent=35 // pred_region
          %s390 = smul.u32 2, %s26
          %s392 = ssub.s32 256, 256
          %393 = vsyncadd %s383, %s392
          %s394 = smul.addr %s25, 4
          %s395 = sadd.s32 %s390, %s394
          %s396 = smul.addr %s395, 64
          %s397 = scalar_lea.hbm %s4, %s396
          %s398 = sshll.u32 %s386, 4
          %s399 = int_to_ptr.vmem [resolvable:$true] %s398
          %404 = dma.vmem_to_hbm [thread:$0]  %s399, 256, %s397, %s383, 128, 128, 8
        $region44: #{tpu_custom_call.1} parent=35 // pred_fallthru
          _
      $region36: #{tpu_custom_call.1} parent=5 // pred_fallthru
        _
      %p405 = scmp.le.s32.totalorder 2, %s16
      // Predicated region
      $region45: #{tpu_custom_call.1} parent=5 // pred_check
        %p406 = pneg %p405
      $region46: #{tpu_custom_call.1} parent=5 // pred_check_branch
        %408 = sbr.rel (%p406) target = $region48
      $region47: #{tpu_custom_call.1} parent=5 // pred_region
        %s409 = ssub.s32 %s16, 2
        // Predicated region
        $region49: #{tpu_custom_call.1} parent=47 // pred_check
          %p410 = pneg %p150
        $region50: #{tpu_custom_call.1} parent=47 // pred_check_branch
          %412 = sbr.rel (%p410) target = $region52
        $region51: #{tpu_custom_call.1} parent=47 // pred_region
          %s413 = sand.u32 %s135, 1
          %s414 = scalar_lea.sflag [#allocation4], %s413
          %s415 = sand.u32 %s135, 1
          %s416 = smul.addr %s415, 16
          %s417 = scalar_lea.vmem [#allocation5], %s416
          %418 = dma.done %s414, 256
        $region52: #{tpu_custom_call.1} parent=47 // pred_fallthru
          _
      $region48: #{tpu_custom_call.1} parent=5 // pred_fallthru
        _
    $region6: #{tpu_custom_call.1} parent=1 // loop_footer
      %s20 = sadd.s32 1, %s16
    $region7: #{tpu_custom_call.1} parent=1 // loop_footer_branch
      %15 = sbr.rel target = $region3
    $region8: #{tpu_custom_call.1} parent=1 // loop_exit
      _
    %419 = vsyncpa [#allocation3], 1
    %s420 = scalar_lea.sflag [#allocation3], 1
    %421 = vsyncpa %s420, 1
    %422 = vsyncpa [#allocation4], 1
    %s423 = scalar_lea.sflag [#allocation4], 1
    %424 = vsyncpa %s423, 1

</llo_original>
